<compile_context>
chip_gen: v5e
topology: v5e:2x2
jax: 0.10.0
libtpu: 0.0.40
codegen_flags: <defaults>
</compile_context>

<pallas_src>
import jax
import jax.numpy as jnp
from jax.experimental import pallas as pl
from jax.experimental.pallas import tpu as pltpu


def _sigmoid_kernel(x_ref, o_ref):
    # Single-EUP sigmoid on the native dtype of the tile.
    o_ref[...] = jax.nn.sigmoid(x_ref[...]).astype(o_ref.dtype)


def _round_up(a, b):
    return ((a + b - 1) // b) * b


def _sublane_packing(dtype):
    # f32 -> 8, bf16 -> 16, int8/fp8 -> 32 (sub-32-bit dtypes pack along sublanes).
    itemsize = jnp.dtype(dtype).itemsize
    return max(8, (32 // (itemsize * 8)) * 8)


def _vmem_budget():
    """(target_block_bytes, vmem_limit_bytes), gated by TPU generation."""
    vmem = None
    try:
        info = pltpu.get_tpu_info()
        for attr in ("vmem_capacity_bytes", "vmem_size_bytes", "vmem_bytes"):
            v = getattr(info, attr, None)
            if isinstance(v, int) and v > 0:
                vmem = v
                break
    except Exception:
        vmem = None
    if vmem is not None and vmem >= 96 * 1024 * 1024:
        # v5e / v6e: 128 MiB physical VMEM -> bigger blocks amortize per-step overhead.
        return 16 * 1024 * 1024, 96 * 1024 * 1024
    # v7x (64 MiB per TensorCore) or unknown: keep resident footprint well under 64 MiB.
    # 8 MiB block * (in + out) * double-buffer = 32 MiB resident.
    return 8 * 1024 * 1024, 48 * 1024 * 1024


def _pick_cols(shape, n, max_cols=4096):
    """Lane-dense column width: a multiple of 128 that divides n, preferring a
    fold of the trailing dims (so the reshape is pure metadata). 0 if none."""
    best = 0
    fold = 1
    for d in reversed(shape):
        fold *= int(d)
        if fold > max_cols:
            break
        if fold % 128 == 0:
            best = fold
    if best:
        return best
    if n % 128 == 0:
        for c in (4096, 2048, 1024, 512, 256, 128):
            if n % c == 0:
                return c
    return 0


def _choose_tiling(rows, cols, itemsize, packing, target_block_bytes):
    """Largest dtype-aligned row tile within the block budget; keep the grid
    length >= 2 (preferably even) so v7x's two TensorCores both get work."""
    tile_rows = (target_block_bytes // (cols * itemsize)) // packing * packing
    tile_rows = max(packing, tile_rows)
    tile_rows = min(tile_rows, _round_up(rows, packing))
    grid_n = pl.cdiv(rows, tile_rows)
    if grid_n == 1 and rows >= 2 * packing:
        tile_rows = _round_up(pl.cdiv(rows, 2), packing)
        grid_n = pl.cdiv(rows, tile_rows)
    if grid_n > 1 and grid_n % 2 == 1:
        alt = _round_up(pl.cdiv(rows, grid_n + 1), packing)
        if alt >= packing and pl.cdiv(rows, alt) % 2 == 0:
            tile_rows, grid_n = alt, pl.cdiv(rows, alt)
    return tile_rows, grid_n


def _run_sigmoid_2d(x2d, *, packing, target_block_bytes, vmem_limit_bytes):
    rows, cols = x2d.shape
    itemsize = jnp.dtype(x2d.dtype).itemsize
    total_bytes = rows * cols * itemsize

    if rows < 2 * packing or total_bytes <= 1024 * 1024:
        # Small-input fast path: one full-array block (block_shape == array dims,
        # so no (8,128) divisibility requirement), grid=(1,).
        tile_rows, grid_n = rows, 1
    else:
        tile_rows, grid_n = _choose_tiling(
            rows, cols, itemsize, packing, target_block_bytes
        )

    return pl.pallas_call(
        _sigmoid_kernel,
        out_shape=jax.ShapeDtypeStruct((rows, cols), x2d.dtype),
        grid=(grid_n,),
        in_specs=[pl.BlockSpec((tile_rows, cols), lambda i: (i, 0))],
        out_specs=pl.BlockSpec((tile_rows, cols), lambda i: (i, 0)),
        compiler_params=pltpu.CompilerParams(
            dimension_semantics=("parallel",),
            vmem_limit_bytes=vmem_limit_bytes,
        ),
    )(x2d)


def classifier_add_a_forward(x, *, target_block_bytes=None, vmem_limit_bytes=None):
    """Applies elementwise sigmoid via a tiled, lane-dense Pallas TPU kernel."""
    orig_shape = x.shape
    dtype = x.dtype
    n = x.size
    if n == 0:
        return x

    blk_default, vmem_default = _vmem_budget()
    if target_block_bytes is None:
        target_block_bytes = blk_default
    if vmem_limit_bytes is None:
        vmem_limit_bytes = vmem_default

    packing = _sublane_packing(dtype)
    cols = _pick_cols(orig_shape, n)

    if cols:
        # No padding, no trailing slice: pure reshape to a lane-dense 2-D slab.
        rows = n // cols
        out2d = _run_sigmoid_2d(
            x.reshape(rows, cols),
            packing=packing,
            target_block_bytes=target_block_bytes,
            vmem_limit_bytes=vmem_limit_bytes,
        )
        return out2d.reshape(orig_shape)

    # Ragged fallback (n not a multiple of 128): pad the flat array only up to
    # the next lane row (<= 127 extra elements), never up to a tile multiple;
    # the last grid block may overhang and Pallas masks its OOB rows.
    lane = 128
    padded_n = _round_up(n, lane)
    x_flat = x.reshape(-1)
    if padded_n != n:
        x_flat = jnp.pad(x_flat, (0, padded_n - n))
    out2d = _run_sigmoid_2d(
        x_flat.reshape(padded_n // lane, lane),
        packing=packing,
        target_block_bytes=target_block_bytes,
        vmem_limit_bytes=vmem_limit_bytes,
    )
    out_flat = out2d.reshape(-1)
    if padded_n != n:
        out_flat = out_flat[:n]
    return out_flat.reshape(orig_shape)


if __name__ == "__main__":
    key = jax.random.PRNGKey(0)
    # input_dim in the module __init__ is unused (Sigmoid ignores its args);
    # use features=128 consistent with the constructor call, batch=8.
    x = jax.random.normal(key, (8, 128), dtype=jnp.float32)

    ref = jax.nn.sigmoid(x)

    out = jax.block_until_ready(classifier_add_a_forward(x))

    assert out.shape == ref.shape
    assert jnp.allclose(out, ref, atol=1e-6), "mismatch vs reference"

    # TODO(synk): PyTorch forward has no return statement (returns None);
    # kernel returns sigmoid(x), the actual computed value.
    print("KERNEL_OK")
</pallas_src>

<mosaic_0001>
module attributes {stable_mosaic.version = 11 : i64} {
  func.func @_sigmoid_kernel(%arg0: i32, %arg1: memref<1x1024xf32, #tpu.memory_space<vmem>>, %arg2: memref<1x1024xf32, #tpu.memory_space<vmem>>) attributes {dimension_semantics = [#tpu.dimension_semantics<parallel>], iteration_bounds = array<i64: 1>, scalar_prefetch = 0 : i64, scratch_operands = 0 : i64, tpu.core_type = #tpu.core_type<tc>, window_params = [{transform_indices = @transform_0, window_bounds = array<i64: 1, 1024>}, {transform_indices = @transform_1, window_bounds = array<i64: 1, 1024>}]} {
    %c0 = arith.constant 0 : index
    %c0_0 = arith.constant 0 : index
    %0 = vector.load %arg1[%c0, %c0_0] : memref<1x1024xf32, #tpu.memory_space<vmem>>, vector<1x1024xf32>
    %1 = arith.negf %0 : vector<1x1024xf32>
    %2 = math.exp %1 : vector<1x1024xf32>
    %cst = arith.constant 1.000000e+00 : f32
    %3 = vector.broadcast %cst : f32 to vector<1x1024xf32>
    %4 = arith.addf %3, %2 : vector<1x1024xf32>
    %5 = arith.divf %3, %4 : vector<1x1024xf32>
    %c0_1 = arith.constant 0 : index
    %c0_2 = arith.constant 0 : index
    %6 = vector.load %arg2[%c0_1, %c0_2] : memref<1x1024xf32, #tpu.memory_space<vmem>>, vector<1x1024xf32>
    tpu.vector_store %arg2[%c0_1, %c0_2], %5 {strides = array<i32>} : memref<1x1024xf32, #tpu.memory_space<vmem>>, vector<1x1024xf32>,
    return
  }
  func.func @transform_0(%arg0: i32) -> (i32, i32) {
    %c0_i32 = arith.constant 0 : i32
    %c0_i32_0 = arith.constant 0 : i32
    return %arg0, %c0_i32 : i32, i32
  }
  func.func @transform_1(%arg0: i32) -> (i32, i32) {
    %c0_i32 = arith.constant 0 : i32
    %c0_i32_0 = arith.constant 0 : i32
    return %arg0, %c0_i32 : i32, i32
  }
}

</mosaic_0001>

<llo_original>
// kernel: tpu_custom_call.1
$region0: #{tpu_custom_call.1}
  #allocation0 [shape = 'u32[]', space=smem, size = 0x4, offset = 0x4, fixed_abs, tag = 'smem constant byte address 0x4 - core index']
  #allocation1 [shape = 'u32[72,128]{1,0:T(1,128)}', space=vmem, size = 0x9000, scoped, tag = 'internal scratch']
  %s0 = inlined_call_operand.hbm [shape: f32[1,1024], index: 0, kind: input, shape index: {}]
  %s1 = inlined_call_operand.hbm [shape: f32[1,1024], index: 1, kind: output, shape index: {}]
  %s2 = sld [smem:[#allocation0]]
  $region18: #{tpu_custom_call.1} parent=0
    _
  %s4 = ssub.s32 1, %s2
  %s5 = scalar_select 0, %s4, %s2
  $region1: #{tpu_custom_call.1} parent=0
    #allocation2 [shape = 'u8[4096]{0}', space=vmem, size = 0x1000, scoped, tag = 'input window, operand 0, single buffered']
    #allocation3 [shape = 's32[1]{0}', space=sflag, size = 0x4, scoped, tag = 'scoped memory for tpu_custom_call.1']
    #allocation4 [shape = 's32[1]{0}', space=sflag, size = 0x4, scoped, tag = 'scoped memory for tpu_custom_call.1']
    #allocation5 [shape = 'u8[4096]{0}', space=vmem, size = 0x1000, scoped, tag = 'output window, operand 0, single buffered']
    %6 = vsyncpa [#allocation3], 0
    %7 = vsyncpa [#allocation4], 0
    // Predicated region
    $region2: #{tpu_custom_call.1} parent=1 // pred_check
      _
    $region3: #{tpu_custom_call.1} parent=1 // pred_check_branch
      %9 = sbr.rel (0) target = $region5
    $region4: #{tpu_custom_call.1} parent=1 // pred_region
      %11 = vsyncadd [#allocation3], 0
      %s13 = sshll.u32 %s0, 4
      %s14 = int_to_ptr.hbm [resolvable:$true] %s13
      %s15 = sshll.u32 [#allocation2], 4
      %s16 = int_to_ptr.vmem [resolvable:$true] %s15
      %18 = dma.hbm_to_vmem [thread:$0]  %s14, 128, %s16, [#allocation3]
    $region5: #{tpu_custom_call.1} parent=1 // pred_fallthru
      _
    // Predicated region
    $region6: #{tpu_custom_call.1} parent=1 // pred_check
      _
    $region7: #{tpu_custom_call.1} parent=1 // pred_check_branch
      %20 = sbr.rel (0) target = $region9
    $region8: #{tpu_custom_call.1} parent=1 // pred_region
      %22 = dma.done [#allocation3], 128
    $region9: #{tpu_custom_call.1} parent=1 // pred_fallthru
      _
    %v23 = vld [vmem:[#allocation2] sm:$0xff]
    %v24 = vxor.u32 %v23, 2147483648
    %v25 = vmul.f32 %v24, 1.442695
    %v26 = vpow.pop %v25
    %v27 = vadd.f32 %v26, 1.0
    %v28 = vrcp.pop %v27
    %v29 = vmul.f32 %v27, %v28
    %v30 = vsub.f32 1.0, %v29
    %v31 = vmul.f32 %v28, %v30
    %v32 = vadd.f32 %v28, %v31
    %vm33 = vweird.f32 %v27
    %vm34 = vweird.f32 %v28
    %vm35 = vmor %vm33, %vm34
    %v36 = vsel %vm35, %v28, %v32
    %v37 = vand.u32 2147483647, %v27
    %vm38 = vcmp.eq.f32.partialorder %v37, 8.507059e+37
    %v39 = vand.u32 %v27, 2147483648
    %v40 = vor.u32 1.1754944e-38, %v39
    %v41 = vsel %vm38, %v40, %v36
    %v42 = vmul.f32 1.0, %v41
    %43 = vst [vmem:[#allocation5] sm:$0xff] %v42
    // Predicated region
    $region10: #{tpu_custom_call.1} parent=1 // pred_check
      _
    $region11: #{tpu_custom_call.1} parent=1 // pred_check_branch
      %45 = sbr.rel (0) target = $region13
    $region12: #{tpu_custom_call.1} parent=1 // pred_region
      %47 = vsyncadd [#allocation4], 0
      %s49 = sshll.u32 [#allocation5], 4
      %s50 = int_to_ptr.vmem [resolvable:$true] %s49
      %s51 = sshll.u32 %s1, 4
      %s52 = int_to_ptr.hbm [resolvable:$true] %s51
      %54 = dma.vmem_to_hbm [thread:$0]  %s50, 128, %s52, [#allocation4]
    $region13: #{tpu_custom_call.1} parent=1 // pred_fallthru
      _
    // Predicated region
    $region14: #{tpu_custom_call.1} parent=1 // pred_check
      _
    $region15: #{tpu_custom_call.1} parent=1 // pred_check_branch
      %56 = sbr.rel (0) target = $region17
    $region16: #{tpu_custom_call.1} parent=1 // pred_region
      %58 = dma.done [#allocation4], 128
    $region17: #{tpu_custom_call.1} parent=1 // pred_fallthru
      _
    %59 = vsyncpa [#allocation3], 1
    %60 = vsyncpa [#allocation4], 1

</llo_original>
